<compile_context>
chip_gen: v5e
topology: v5e:2x2
jax: 0.10.0
libtpu: 0.0.40
codegen_flags: <defaults>
</compile_context>

<pallas_src>
import functools

import jax
import jax.numpy as jnp
from jax import lax
from jax.experimental import pallas as pl
from jax.experimental.pallas import tpu as pltpu

LANE = 128


def _round_up(x, m):
    return ((x + m - 1) // m) * m


def _cluster_contrastive_kernel(z1_ref, z2c_ref, z2r_ref, out_ref, acc_ref, *,
                                n_valid, tn, pad_cols):
    """One (row-block i, column-block j) grid step.

    acc_ref is a lane-dense (TM, 128) f32 scratch holding partial row sums of
    exp(cos_sim); out_ref (TM, 1) is written only once, in the last-j epilogue,
    with the per-row loss  log(rowsum) - diag_cos  ==  -log(pos / (pos + neg)).
    """
    j = pl.program_id(1)
    n_col_blocks = pl.num_programs(1)

    @pl.when(j == 0)
    def _():
        acc_ref[...] = jnp.zeros_like(acc_ref)

    # (TM, TN) cosine-similarity tile on the MXU (contracting dim 1 of both
    # operands -> no transposed copy of z2), f32 accumulation, exp on the EUP.
    sim = jnp.exp(lax.dot_general(
        z1_ref[...], z2c_ref[...],
        dimension_numbers=(((1,), (1,)), ((), ())),
        preferred_element_type=jnp.float32))

    def _accumulate(tile):
        # Fold the TN columns into one 128-lane strip with pure VPU adds on
        # aligned static slices, then a single read-modify-write of acc_ref.
        partial = tile[:, 0:LANE]
        for k in range(1, tn // LANE):
            partial = partial + tile[:, k * LANE:(k + 1) * LANE]
        acc_ref[...] += partial

    if pad_cols > 0:
        # Only the last column block can contain padded z2 columns (which
        # would otherwise contribute exp(0) = 1 to neg).
        @pl.when(j != n_col_blocks - 1)
        def _():
            _accumulate(sim)

        @pl.when(j == n_col_blocks - 1)
        def _():
            col_ids = lax.broadcasted_iota(jnp.int32, sim.shape, 1)
            _accumulate(jnp.where(j * tn + col_ids < n_valid, sim, 0.0))
    else:
        _accumulate(sim)

    @pl.when(j == n_col_blocks - 1)
    def _():
        # pos[i] = exp(cos_sim(z1[i], z2[i])) on the row-aligned tiles, so
        # log(pos) is just the diagonal cosine similarity (no exp/log needed).
        z1r = z1_ref[...].astype(jnp.float32)
        z2r = z2r_ref[...].astype(jnp.float32)
        diag = jnp.sum(z1r * z2r, axis=-1, keepdims=True)            # (TM, 1)
        rowsum = jnp.sum(acc_ref[...], axis=-1, keepdims=True)       # pos + neg
        out_ref[...] = jnp.log(rowsum) - diag


def cluster_contrastive(tar_embeds, con_embeds, *, use_bf16_matmul=True,
                        tm_max=128, tn_cap=4096,
                        vmem_budget_bytes=16 * 1024 * 1024):
    """Pallas implementation of ClusterContrastive.forward -> scalar loss."""
    assert tar_embeds.ndim == 2 and con_embeds.ndim == 2
    assert tar_embeds.shape == con_embeds.shape
    z1 = tar_embeds.astype(jnp.float32)
    z2 = con_embeds.astype(jnp.float32)
    n, d = z1.shape

    # Normalize once in the wrapper (one fused XLA pass per operand) instead
    # of redundantly re-normalizing every tile inside the kernel.
    def _normalize(z):
        return z * lax.rsqrt(jnp.maximum(
            jnp.sum(z * z, axis=-1, keepdims=True), 1e-30))

    z1n = _normalize(z1)
    z2n = _normalize(z2)

    compute_dtype = jnp.bfloat16 if use_bf16_matmul else jnp.float32
    itemsize = 2 if use_bf16_matmul else 4

    # --- tile sizes -------------------------------------------------------
    # Rows: tm <= 128 so N in (128, 256] still yields 2 "parallel" row blocks
    # (v7x megacore).  Columns: largest multiple of 128 fitting the VMEM
    # budget; when the whole padded column range fits, grid[1] collapses to 1.
    tm = min(tm_max, _round_up(n, 8))
    n_rows = _round_up(n, tm)

    def _vmem_need(tn_):
        blocks = 2 * (tm * d + tn_ * d + tm * d) * itemsize   # double-buffered inputs
        out_blk = 2 * tm * 4
        acc = tm * LANE * 4
        sim = 3 * tm * tn_ * 4                                # sim/exp/mask temporaries
        return blocks + out_blk + acc + sim

    tn = min(_round_up(n, LANE), tn_cap)
    while tn > LANE and _vmem_need(tn) > vmem_budget_bytes:
        tn -= LANE
    n_cols = _round_up(n, tn)
    pad_cols = n_cols - n

    z1_p = jnp.pad(z1n, ((0, n_rows - n), (0, 0))).astype(compute_dtype)
    # Single padded copy of normalized z2 feeds both the column-block spec and
    # the diagonal-aligned spec (n_cols >= n_rows by construction).
    z2_p = jnp.pad(z2n, ((0, n_cols - n), (0, 0))).astype(compute_dtype)

    grid = (n_rows // tm, n_cols // tn)

    kernel = functools.partial(_cluster_contrastive_kernel,
                               n_valid=n, tn=tn, pad_cols=pad_cols)

    per_row = pl.pallas_call(
        kernel,
        out_shape=jax.ShapeDtypeStruct((n_rows, 1), jnp.float32),
        grid_spec=pltpu.PrefetchScalarGridSpec(
            num_scalar_prefetch=0,
            grid=grid,
            in_specs=[
                pl.BlockSpec((tm, d), lambda i, j: (i, 0)),   # z1 row block
                pl.BlockSpec((tn, d), lambda i, j: (j, 0)),   # z2 column block
                pl.BlockSpec((tm, d), lambda i, j: (i, 0)),   # z2 diag-aligned
            ],
            out_specs=pl.BlockSpec((tm, 1), lambda i, j: (i, 0)),
            scratch_shapes=[pltpu.VMEM((tm, LANE), jnp.float32)],
        ),
        compiler_params=pltpu.CompilerParams(
            dimension_semantics=("parallel", "arbitrary"),
            vmem_limit_bytes=32 * 1024 * 1024),
        cost_estimate=pl.CostEstimate(
            flops=2 * n_rows * n_cols * d + 2 * n_rows * d,
            transcendentals=n_rows * n_cols,
            bytes_accessed=itemsize * (2 * n_rows * d + grid[0] * n_cols * d)
                           + 4 * n_rows),
    )(z1_p, z2_p, z2_p)

    # Padded rows are excluded; final mean is a trivial XLA reduce.
    return jnp.mean(per_row[:n, 0])


def _reference(tar_embeds, con_embeds):
    """Pure-JAX reference mirroring the PyTorch code (for sanity check)."""
    z1, z2 = tar_embeds, con_embeds
    n1 = jnp.linalg.norm(z1, axis=-1, keepdims=True)
    n2 = jnp.linalg.norm(z2, axis=-1, keepdims=True)
    sim = jnp.exp((z1 @ z2.T) / (n1 @ n2.T))
    eye = jnp.eye(z1.shape[0])
    pos = jnp.sum(sim * (eye == 1), axis=-1)
    neg = jnp.sum(sim * (eye == 0), axis=-1)
    return jnp.mean(-jnp.log(pos / (pos + neg)))


if __name__ == "__main__":
    key = jax.random.PRNGKey(0)
    k1, k2, k3, k4 = jax.random.split(key, 4)

    # Case 1: small aligned shape (8 clusters, 32-d embeddings).
    tar = jax.random.normal(k1, (8, 32), dtype=jnp.float32)
    con = jax.random.normal(k2, (8, 32), dtype=jnp.float32)
    ref = _reference(tar, con)

    loss_f32 = cluster_contrastive(tar, con, use_bf16_matmul=False)
    jax.block_until_ready(loss_f32)
    assert jnp.allclose(loss_f32, ref, rtol=1e-4, atol=1e-4), (loss_f32, ref)

    loss_bf16 = cluster_contrastive(tar, con)   # default: bf16 MXU operands
    jax.block_until_ready(loss_bf16)
    assert jnp.allclose(loss_bf16, ref, rtol=5e-2, atol=5e-2), (loss_bf16, ref)

    # Case 2: ragged shape (13 clusters, 48-d) exercising padded rows/columns.
    tar2 = jax.random.normal(k3, (13, 48), dtype=jnp.float32)
    con2 = jax.random.normal(k4, (13, 48), dtype=jnp.float32)
    ref2 = _reference(tar2, con2)

    loss2_f32 = cluster_contrastive(tar2, con2, use_bf16_matmul=False)
    jax.block_until_ready(loss2_f32)
    assert jnp.allclose(loss2_f32, ref2, rtol=1e-4, atol=1e-4), (loss2_f32, ref2)

    loss2_bf16 = cluster_contrastive(tar2, con2)
    jax.block_until_ready(loss2_bf16)
    assert jnp.allclose(loss2_bf16, ref2, rtol=5e-2, atol=5e-2), (loss2_bf16, ref2)

    print("KERNEL_OK")
</pallas_src>

<mosaic_0001>
module attributes {stable_mosaic.version = 11 : i64} {
  func.func @_cluster_contrastive_kernel(%arg0: i32, %arg1: i32, %arg2: memref<8x32xf32, #tpu.memory_space<vmem>>, %arg3: memref<128x32xf32, #tpu.memory_space<vmem>>, %arg4: memref<8x32xf32, #tpu.memory_space<vmem>>, %arg5: memref<8x1xf32, #tpu.memory_space<vmem>>, %arg6: memref<8x128xf32, #tpu.memory_space<vmem>>) attributes {dimension_semantics = [#tpu.dimension_semantics<parallel>, #tpu.dimension_semantics<arbitrary>], iteration_bounds = array<i64: 1, 1>, scalar_prefetch = 0 : i64, scratch_operands = 1 : i64, tpu.core_type = #tpu.core_type<tc>, window_params = [{transform_indices = @transform_0, window_bounds = array<i64: 8, 32>}, {transform_indices = @transform_1, window_bounds = array<i64: 128, 32>}, {transform_indices = @transform_2, window_bounds = array<i64: 8, 32>}, {transform_indices = @transform_3, window_bounds = array<i64: 8, 1>}]} {
    %c0_i32 = arith.constant 0 : i32
    %0 = arith.cmpi eq, %arg1, %c0_i32 : i32
    %1 = arith.extui %0 : i1 to i32
    %c0_i32_0 = arith.constant 0 : i32
    %2 = arith.cmpi ne, %1, %c0_i32_0 : i32
    scf.if %2 {
      %cst_10 = arith.constant 0.000000e+00 : f32
      %16 = vector.broadcast %cst_10 : f32 to vector<8x128xf32>
      %c0_11 = arith.constant 0 : index
      %c0_12 = arith.constant 0 : index
      %17 = vector.load %arg6[%c0_11, %c0_12] : memref<8x128xf32, #tpu.memory_space<vmem>>, vector<8x128xf32>
      tpu.vector_store %arg6[%c0_11, %c0_12], %16 {strides = array<i32>} : memref<8x128xf32, #tpu.memory_space<vmem>>, vector<8x128xf32>,
    } else {
    }
    %c0 = arith.constant 0 : index
    %c0_1 = arith.constant 0 : index
    %3 = vector.load %arg2[%c0, %c0_1] : memref<8x32xf32, #tpu.memory_space<vmem>>, vector<8x32xf32>
    %c0_2 = arith.constant 0 : index
    %c0_3 = arith.constant 0 : index
    %4 = vector.load %arg3[%c0_2, %c0_3] : memref<128x32xf32, #tpu.memory_space<vmem>>, vector<128x32xf32>
    %cst = arith.constant dense<0.000000e+00> : vector<8x128xf32>
    %5 = tpu.matmul %3, %4, %cst {dimension_numbers = #tpu.dot_dimension_numbers<[1], [1], [0], [0], [0, 0, 1, 0], [], []>} : vector<8x32xf32>, vector<128x32xf32>, vector<8x128xf32> -> vector<8x128xf32>
    %6 = math.exp %5 : vector<8x128xf32>
    %c0_i32_4 = arith.constant 0 : i32
    %7 = arith.cmpi ne, %arg1, %c0_i32_4 : i32
    %8 = arith.extui %7 : i1 to i32
    %c0_i32_5 = arith.constant 0 : i32
    %9 = arith.cmpi ne, %8, %c0_i32_5 : i32
    scf.if %9 {
      %c0_10 = arith.constant 0 : index
      %c0_11 = arith.constant 0 : index
      %16 = vector.load %arg6[%c0_10, %c0_11] : memref<8x128xf32, #tpu.memory_space<vmem>>, vector<8x128xf32>
      %17 = arith.addf %16, %6 : vector<8x128xf32>
      %c0_12 = arith.constant 0 : index
      %c0_13 = arith.constant 0 : index
      %18 = vector.load %arg6[%c0_12, %c0_13] : memref<8x128xf32, #tpu.memory_space<vmem>>, vector<8x128xf32>
      tpu.vector_store %arg6[%c0_12, %c0_13], %17 {strides = array<i32>} : memref<8x128xf32, #tpu.memory_space<vmem>>, vector<8x128xf32>,
    } else {
    }
    %c0_i32_6 = arith.constant 0 : i32
    %10 = arith.cmpi eq, %arg1, %c0_i32_6 : i32
    %11 = arith.extui %10 : i1 to i32
    %c0_i32_7 = arith.constant 0 : i32
    %12 = arith.cmpi ne, %11, %c0_i32_7 : i32
    scf.if %12 {
      %16 = tpu.iota {dimensions = array<i32: 1>} : vector<8x128xi32>
      %c128_i32 = arith.constant 128 : i32
      %17 = arith.muli %arg1, %c128_i32 : i32
      %18 = vector.broadcast %17 : i32 to vector<8x128xi32>
      %19 = arith.addi %18, %16 : vector<8x128xi32>
      %c8_i32 = arith.constant 8 : i32
      %20 = vector.broadcast %c8_i32 : i32 to vector<8x128xi32>
      %21 = arith.cmpi slt, %19, %20 : vector<8x128xi32>
      %cst_10 = arith.constant 0.000000e+00 : f32
      %22 = vector.broadcast %cst_10 : f32 to vector<8x128xf32>
      %23 = arith.select %21, %6, %22 : vector<8x128xi1>, vector<8x128xf32>
      %c0_11 = arith.constant 0 : index
      %c0_12 = arith.constant 0 : index
      %24 = vector.load %arg6[%c0_11, %c0_12] : memref<8x128xf32, #tpu.memory_space<vmem>>, vector<8x128xf32>
      %25 = arith.addf %24, %23 : vector<8x128xf32>
      %c0_13 = arith.constant 0 : index
      %c0_14 = arith.constant 0 : index
      %26 = vector.load %arg6[%c0_13, %c0_14] : memref<8x128xf32, #tpu.memory_space<vmem>>, vector<8x128xf32>
      tpu.vector_store %arg6[%c0_13, %c0_14], %25 {strides = array<i32>} : memref<8x128xf32, #tpu.memory_space<vmem>>, vector<8x128xf32>,
    } else {
    }
    %c0_i32_8 = arith.constant 0 : i32
    %13 = arith.cmpi eq, %arg1, %c0_i32_8 : i32
    %14 = arith.extui %13 : i1 to i32
    %c0_i32_9 = arith.constant 0 : i32
    %15 = arith.cmpi ne, %14, %c0_i32_9 : i32
    scf.if %15 {
      %c0_10 = arith.constant 0 : index
      %c0_11 = arith.constant 0 : index
      %16 = vector.load %arg2[%c0_10, %c0_11] : memref<8x32xf32, #tpu.memory_space<vmem>>, vector<8x32xf32>
      %c0_12 = arith.constant 0 : index
      %c0_13 = arith.constant 0 : index
      %17 = vector.load %arg4[%c0_12, %c0_13] : memref<8x32xf32, #tpu.memory_space<vmem>>, vector<8x32xf32>
      %18 = arith.mulf %16, %17 : vector<8x32xf32>
      %cst_14 = arith.constant dense<0.000000e+00> : vector<8xf32>
      %19 = vector.multi_reduction <add>, %18, %cst_14 [1] : vector<8x32xf32> to vector<8xf32>
      %20 = vector.shape_cast %19 : vector<8xf32> to vector<8x1xf32>
      %c0_15 = arith.constant 0 : index
      %c0_16 = arith.constant 0 : index
      %21 = vector.load %arg6[%c0_15, %c0_16] : memref<8x128xf32, #tpu.memory_space<vmem>>, vector<8x128xf32>
      %cst_17 = arith.constant dense<0.000000e+00> : vector<8xf32>
      %22 = vector.multi_reduction <add>, %21, %cst_17 [1] : vector<8x128xf32> to vector<8xf32>
      %23 = vector.shape_cast %22 : vector<8xf32> to vector<8x1xf32>
      %24 = math.log %23 : vector<8x1xf32>
      %25 = arith.subf %24, %20 : vector<8x1xf32>
      %c0_18 = arith.constant 0 : index
      %c0_19 = arith.constant 0 : index
      %26 = vector.load %arg5[%c0_18, %c0_19] : memref<8x1xf32, #tpu.memory_space<vmem>>, vector<8x1xf32>
      tpu.vector_store %arg5[%c0_18, %c0_19], %25 {strides = array<i32>} : memref<8x1xf32, #tpu.memory_space<vmem>>, vector<8x1xf32>,
    } else {
    }
    return
  }
  func.func @transform_0(%arg0: i32, %arg1: i32) -> (i32, i32) {
    %c0_i32 = arith.constant 0 : i32
    %c0_i32_0 = arith.constant 0 : i32
    return %arg0, %c0_i32 : i32, i32
  }
  func.func @transform_1(%arg0: i32, %arg1: i32) -> (i32, i32) {
    %c0_i32 = arith.constant 0 : i32
    %c0_i32_0 = arith.constant 0 : i32
    return %arg1, %c0_i32 : i32, i32
  }
  func.func @transform_2(%arg0: i32, %arg1: i32) -> (i32, i32) {
    %c0_i32 = arith.constant 0 : i32
    %c0_i32_0 = arith.constant 0 : i32
    return %arg0, %c0_i32 : i32, i32
  }
  func.func @transform_3(%arg0: i32, %arg1: i32) -> (i32, i32) {
    %c0_i32 = arith.constant 0 : i32
    %c0_i32_0 = arith.constant 0 : i32
    return %arg0, %c0_i32 : i32, i32
  }
}

</mosaic_0001>

<llo_original>
// kernel: tpu_custom_call.1
$region0: #{tpu_custom_call.1}
  #allocation0 [shape = 'u32[]', space=smem, size = 0x4, offset = 0x4, fixed_abs, tag = 'smem constant byte address 0x4 - core index']
  #allocation1 [shape = 'u32[72,128]{1,0:T(1,128)}', space=vmem, size = 0x9000, scoped, tag = 'internal scratch']
  #allocation2 [shape = 'f32[8,128]{1,0:T(8,128)}', space=vmem, size = 0x1000, scoped, tag = 'scratch operand']
  %s0 = inlined_call_operand.vmem [shape: f32[8,32], index: 0, kind: input, shape index: {}]
  %s1 = inlined_call_operand.vmem [shape: f32[128,32], index: 1, kind: input, shape index: {}]
  %s2 = inlined_call_operand.vmem [shape: f32[128,32], index: 2, kind: input, shape index: {}]
  %s3 = inlined_call_operand.vmem [shape: f32[8,1], index: 3, kind: output, shape index: {}]
  %s4 = sld [smem:[#allocation0]]
  $region34: #{tpu_custom_call.1} parent=0
    _
  %s6 = ssub.s32 1, %s4
  %s7 = scalar_select 0, %s6, %s4
  // Predicated region
  $region2: #{tpu_custom_call.1} parent=0 // pred_check
    _
  $region3: #{tpu_custom_call.1} parent=0 // pred_check_branch
    %9 = sbr.rel (0) target = $region5
  $region4: #{tpu_custom_call.1} parent=0 // pred_region
    _
  $region5: #{tpu_custom_call.1} parent=0 // pred_fallthru
    _
  // Predicated region
  $region6: #{tpu_custom_call.1} parent=0 // pred_check
    _
  $region7: #{tpu_custom_call.1} parent=0 // pred_check_branch
    %11 = sbr.rel (0) target = $region9
  $region8: #{tpu_custom_call.1} parent=0 // pred_region
    _
  $region9: #{tpu_custom_call.1} parent=0 // pred_fallthru
    _
  // Predicated region
  $region10: #{tpu_custom_call.1} parent=0 // pred_check
    _
  $region11: #{tpu_custom_call.1} parent=0 // pred_check_branch
    %13 = sbr.rel (0) target = $region13
  $region12: #{tpu_custom_call.1} parent=0 // pred_region
    _
  $region13: #{tpu_custom_call.1} parent=0 // pred_fallthru
    _
  %p14 = scmp.eq.s32.totalorder 0, 0
  // Predicated region
  $region14: #{tpu_custom_call.1} parent=0 // pred_check
    %p15 = pneg %p14
  $region15: #{tpu_custom_call.1} parent=0 // pred_check_branch
    %17 = sbr.rel (%p15) target = $region17
  $region16: #{tpu_custom_call.1} parent=0 // pred_region
    %18 = vst [vmem:[#allocation2] sm:$0xff] 0.0
  $region17: #{tpu_custom_call.1} parent=0 // pred_fallthru
    _
  %v19 = vld [vmem:[%s0] sm:$0xff]
  %v20 = vld [vmem:[%s1] sm:$0xff]
  %v21 = vld [vmem:[%s1 + $0x8] sm:$0xff]
  %v22 = vld [vmem:[%s1 + $0x10] sm:$0xff]
  %v23 = vld [vmem:[%s1 + $0x18] sm:$0xff]
  %v24 = vld [vmem:[%s1 + $0x20] sm:$0xff]
  %v25 = vld [vmem:[%s1 + $0x28] sm:$0xff]
  %v26 = vld [vmem:[%s1 + $0x30] sm:$0xff]
  %v27 = vld [vmem:[%s1 + $0x38] sm:$0xff]
  %v28 = vld [vmem:[%s1 + $0x40] sm:$0xff]
  %v29 = vld [vmem:[%s1 + $0x48] sm:$0xff]
  %v30 = vld [vmem:[%s1 + $0x50] sm:$0xff]
  %v31 = vld [vmem:[%s1 + $0x58] sm:$0xff]
  %v32 = vld [vmem:[%s1 + $0x60] sm:$0xff]
  %v33 = vld [vmem:[%s1 + $0x68] sm:$0xff]
  %v34 = vld [vmem:[%s1 + $0x70] sm:$0xff]
  %v35 = vld [vmem:[%s1 + $0x78] sm:$0xff]
  %vm36 = vcmask 261120
  %v38 = vsel %vm36, %v19, 0
  %v41 = vsel %vm36, %v20, 0
  %v44 = vsel %vm36, %v21, 0
  %v47 = vsel %vm36, %v22, 0
  %v50 = vsel %vm36, %v23, 0
  %v53 = vsel %vm36, %v24, 0
  %v56 = vsel %vm36, %v25, 0
  %v59 = vsel %vm36, %v26, 0
  %v62 = vsel %vm36, %v27, 0
  %v65 = vsel %vm36, %v28, 0
  %v68 = vsel %vm36, %v29, 0
  %v71 = vsel %vm36, %v30, 0
  %v74 = vsel %vm36, %v31, 0
  %v77 = vsel %vm36, %v32, 0
  %v80 = vsel %vm36, %v33, 0
  %v83 = vsel %vm36, %v34, 0
  %v86 = vsel %vm36, %v35, 0
  %88 = vmatpush.xpose.msra.mxu0 %v86
  %89 = vmatpush.xpose.msra.mxu0 %v83
  %90 = vmatpush.xpose.msra.mxu0 %v80
  %91 = vmatpush.xpose.msra.mxu0 %v77
  %92 = vmatpush.xpose.msra.mxu0 %v74
  %93 = vmatpush.xpose.msra.mxu0 %v71
  %94 = vmatpush.xpose.msra.mxu0 %v68
  %95 = vmatpush.xpose.msra.mxu0 %v65
  %96 = vmatpush.xpose.msra.mxu0 %v62
  %97 = vmatpush.xpose.msra.mxu0 %v59
  %98 = vmatpush.xpose.msra.mxu0 %v56
  %99 = vmatpush.xpose.msra.mxu0 %v53
  %100 = vmatpush.xpose.msra.mxu0 %v50
  %101 = vmatpush.xpose.msra.mxu0 %v47
  %102 = vmatpush.xpose.msra.mxu0 %v44
  %103 = vmatpush.xpose.msra.mxu0 %v41
  %104 = vmatmul.f32.gmra.mxu0 %v38
  %v105 = vpop.f32.mrf.mxu0
  %v106 = vadd.f32 0.0, %v105
  %107 = vdwg.mxu0
  %v108 = vmul.f32 %v106, 1.442695
  %v109 = vpow.pop %v108
  %p110 = scmp.ne.s32.totalorder 0, 0
  // Predicated region
  $region18: #{tpu_custom_call.1} parent=0 // pred_check
    %p111 = pneg %p110
  $region19: #{tpu_custom_call.1} parent=0 // pred_check_branch
    %113 = sbr.rel (%p111) target = $region21
  $region20: #{tpu_custom_call.1} parent=0 // pred_region
    %v114 = vld [vmem:[#allocation2] sm:$0xff]
    %v115 = vadd.f32 %v114, %v109
    %116 = vst [vmem:[#allocation2] sm:$0xff] %v115
  $region21: #{tpu_custom_call.1} parent=0 // pred_fallthru
    _
  // Predicated region
  $region22: #{tpu_custom_call.1} parent=0 // pred_check
    %p117 = pneg %p14
  $region23: #{tpu_custom_call.1} parent=0 // pred_check_branch
    %119 = sbr.rel (%p117) target = $region25
  $region24: #{tpu_custom_call.1} parent=0 // pred_region
    %v120 = vlaneseq
    %v121 = vand.u32 %v120, 127
    %s122 = smul.u32 0, 128
    %v123 = vstv %s122
    %v124 = vadd.s32 %v123, %v121
    %vm125 = vcmp.lt.s32.totalorder %v124, 8
    %v126 = vsel %vm125, %v109, 0.0
    %v127 = vld [vmem:[#allocation2] sm:$0xff]
    %v128 = vadd.f32 %v127, %v126
    %129 = vst [vmem:[#allocation2] sm:$0xff] %v128
    %v130 = vld [vmem:[%s0] sm:$0xff]
    %v131 = vld [vmem:[%s2] sm:$0xff]
    %v132 = vmul.f32 %v130, %v131
    %v133 = vsel %vm36, %v132, 0.0
    %134 = vadd.xlane.f32.xlu0 %v133
    %v135 = vpop.xlane.xlu0 %134
    %v136 = vld [vmem:[#allocation2] sm:$0xff]
    %137 = vadd.xlane.f32.xlu0 %v136
    %v138 = vpop.xlane.xlu0 %137
    %v139 = vlog2.pop %v138
    %v140 = vmul.f32 %v139, 0.6931472
    %v141 = vsub.f32 %v140, %v135
    %vm142 = vcmask 7168
    %143 = vst.msk [vmem:[%s3] sm:$0xff] %vm142, %v141
  $region25: #{tpu_custom_call.1} parent=0 // pred_fallthru
    _
  // Predicated region
  $region26: #{tpu_custom_call.1} parent=0 // pred_check
    _
  $region27: #{tpu_custom_call.1} parent=0 // pred_check_branch
    %145 = sbr.rel (0) target = $region29
  $region28: #{tpu_custom_call.1} parent=0 // pred_region
    _
  $region29: #{tpu_custom_call.1} parent=0 // pred_fallthru
    _
  // Predicated region
  $region30: #{tpu_custom_call.1} parent=0 // pred_check
    _
  $region31: #{tpu_custom_call.1} parent=0 // pred_check_branch
    %147 = sbr.rel (0) target = $region33
  $region32: #{tpu_custom_call.1} parent=0 // pred_region
    _
  $region33: #{tpu_custom_call.1} parent=0 // pred_fallthru
    _

</llo_original>
